<compile_context>
chip_gen: v6e
topology: v6e:2x2x1
jax: 0.10.0
libtpu: 0.0.40
codegen_flags: <defaults>
</compile_context>

<pallas_src>
import functools

import jax
import jax.numpy as jnp
from jax import lax
from jax.experimental import pallas as pl
from jax.experimental.pallas import tpu as pltpu


def _mpc_forward_kernel(x0_ref, u_seq_ref, W_ref, Qf_ref, cost_ref):
    """One batch-block: vreg-resident rollout + cost, single fused matmul/step."""
    W = W_ref[...]                       # (dimz, dimx + dimz)
    Qf = Qf_ref[...]                     # (dimx, dimx)
    N = u_seq_ref.shape[0]
    dimx = x0_ref.shape[-1]
    dimu = u_seq_ref.shape[-1]
    nb = x0_ref.shape[0]

    x0 = x0_ref[...]                                      # (nb, dimx)
    quad0 = jnp.zeros((nb, dimx + dimu), jnp.float32)     # lane-dense accumulator

    def body(k, carry):
        x, quad = carry
        u = u_seq_ref[k]                                  # (nb, dimu), u0 pre-merged
        z = jnp.concatenate([x, u], axis=-1)              # (nb, dimz)
        # One MXU push: [x A^T + u B^T | x Q | u R]
        zw = jnp.dot(z, W, preferred_element_type=jnp.float32)
        x_next = zw[:, :dimx]
        quad = quad + z * zw[:, dimx:]                    # accumulates x'Qx, u'Ru terms
        return (x_next, quad)

    xN, quad = lax.fori_loop(0, N, body, (x0, quad0), unroll=True)

    # terminal cost 0.5 x_N' Qf x_N ; single cross-lane reduce + single store
    xQf = jnp.dot(xN, Qf, preferred_element_type=jnp.float32)
    total = (jnp.sum(quad, axis=-1, keepdims=True)
             + jnp.sum(xQf * xN, axis=-1, keepdims=True))
    cost_ref[...] = 0.5 * total


@functools.partial(jax.jit, static_argnames=("batch_block",))
def mpc_forward_pallas(x0, u_seq, u0, A, B, Q, R, Qf, *, batch_block=512):
    x0 = x0.astype(jnp.float32)
    u_seq = u_seq.astype(jnp.float32)
    u0 = u0.astype(jnp.float32)

    nbatch, dimx = x0.shape
    N, _, dimu = u_seq.shape
    dimz = dimx + dimu

    # Merge the first-stage override into the stored trajectory (no in-kernel select).
    u_seq = u_seq.at[0].set(u0)

    # Fused, pre-transposed right-hand matrix:  Z @ W = [x A^T + u B^T | x Q | u R]
    W = jnp.zeros((dimz, dimx + dimz), jnp.float32)
    W = W.at[:dimx, :dimx].set(A.T.astype(jnp.float32))
    W = W.at[dimx:, :dimx].set(B.T.astype(jnp.float32))
    W = W.at[:dimx, dimx:2 * dimx].set(Q.astype(jnp.float32))
    W = W.at[dimx:, 2 * dimx:].set(R.astype(jnp.float32))
    Qf = Qf.astype(jnp.float32)

    # Batch grid (parallel => shards across TensorCores when nbatch is large).
    bb = batch_block if (nbatch % batch_block == 0) else nbatch
    grid = (nbatch // bb,)

    return pl.pallas_call(
        _mpc_forward_kernel,
        out_shape=jax.ShapeDtypeStruct((nbatch, 1), jnp.float32),
        grid=grid,
        in_specs=[
            pl.BlockSpec((bb, dimx), lambda i: (i, 0)),            # x0 block
            pl.BlockSpec((N, bb, dimu), lambda i: (0, i, 0)),      # u trajectory block
            pl.BlockSpec((dimz, dimx + dimz), lambda i: (0, 0)),   # fused W (replicated)
            pl.BlockSpec((dimx, dimx), lambda i: (0, 0)),          # Qf (replicated)
        ],
        out_specs=pl.BlockSpec((bb, 1), lambda i: (i, 0)),
        compiler_params=pltpu.CompilerParams(
            dimension_semantics=("parallel",)),
    )(x0, u_seq, W, Qf)


class MPC:
    """JAX mirror of maafa.mpc.MPC holding the warm-start solution."""

    def __init__(self, A, B, Q, R, Qf, N, nbatch=1):
        assert nbatch >= 1
        self.A, self.B, self.Q, self.R, self.Qf = A, B, Q, R, Qf
        self.N = N
        self.nbatch = nbatch
        dimx, dimu = A.shape[0], B.shape[1]
        self.dimx, self.dimu = dimx, dimu
        self.x = jnp.zeros((N + 1, nbatch, dimx), jnp.float32)
        self.u = jnp.zeros((N, nbatch, dimu), jnp.float32)
        self.lmd = jnp.zeros((N + 1, nbatch, dimx), jnp.float32)
        self.gmm = jnp.zeros((nbatch, dimu), jnp.float32)

    def forward(self, x0, u0=None):
        if x0.ndim == 1:
            x0 = x0[None, :]
        if u0 is None:
            u0 = self.u[0]
        elif u0.ndim == 1:
            u0 = u0[None, :]
        return mpc_forward_pallas(x0, self.u, u0, self.A, self.B,
                                  self.Q, self.R, self.Qf)

    __call__ = forward


def _reference_forward(x0, u_seq, u0, A, B, Q, R, Qf):
    """Pure-JAX reference for validation."""
    N = u_seq.shape[0]
    x = x0
    cost = jnp.zeros((x0.shape[0], 1), jnp.float32)
    for k in range(N):
        u = u0 if k == 0 else u_seq[k]
        cost = cost + 0.5 * (jnp.sum((x @ Q) * x, axis=-1, keepdims=True)
                             + jnp.sum((u @ R) * u, axis=-1, keepdims=True))
        x = x @ A.T + u @ B.T
    cost = cost + 0.5 * jnp.sum((x @ Qf) * x, axis=-1, keepdims=True)
    return cost


if __name__ == "__main__":
    # Small, deterministic problem: N=8 horizon, nbatch=8, dimx=8, dimu=4.
    N, nbatch, dimx, dimu = 8, 8, 8, 4
    key = jax.random.PRNGKey(0)
    kA, kB, kQ, kR, kQf, kx0, ku0, kus = jax.random.split(key, 8)

    A = 0.9 * jnp.eye(dimx, dtype=jnp.float32) \
        + 0.05 * jax.random.normal(kA, (dimx, dimx), jnp.float32)
    B = 0.1 * jax.random.normal(kB, (dimx, dimu), jnp.float32)

    def _psd(k, n):
        m = jax.random.normal(k, (n, n), jnp.float32)
        return m @ m.T / n + jnp.eye(n, dtype=jnp.float32)

    Q, R, Qf = _psd(kQ, dimx), 0.1 * _psd(kR, dimu), 2.0 * _psd(kQf, dimx)

    mpc = MPC(A, B, Q, R, Qf, N, nbatch=nbatch)
    # Pretend a previous mpc_step produced a (nonzero) warm-start solution.
    mpc.u = 0.5 * jax.random.normal(kus, (N, nbatch, dimu), jnp.float32)

    x0 = jax.random.normal(kx0, (nbatch, dimx), jnp.float32)
    u0 = jax.random.normal(ku0, (nbatch, dimu), jnp.float32)

    v_val = mpc(x0)          # V(x0): uses stored u for all stages
    q_val = mpc(x0, u0)      # Q(x0, u0): u0 overrides the first stage
    jax.block_until_ready((v_val, q_val))

    v_ref = _reference_forward(x0, mpc.u, mpc.u[0], A, B, Q, R, Qf)
    q_ref = _reference_forward(x0, mpc.u, u0, A, B, Q, R, Qf)
    assert jnp.allclose(v_val, v_ref, rtol=1e-5, atol=1e-5), (v_val, v_ref)
    assert jnp.allclose(q_val, q_ref, rtol=1e-5, atol=1e-5), (q_val, q_ref)

    print("KERNEL_OK")
</pallas_src>

<mosaic_0001>
module attributes {stable_mosaic.version = 11 : i64} {
  func.func @_mpc_forward_kernel(%arg0: i32, %arg1: memref<8x8xf32, #tpu.memory_space<vmem>>, %arg2: memref<8x8x4xf32, #tpu.memory_space<vmem>>, %arg3: memref<12x20xf32, #tpu.memory_space<vmem>>, %arg4: memref<8x8xf32, #tpu.memory_space<vmem>>, %arg5: memref<8x1xf32, #tpu.memory_space<vmem>>) attributes {dimension_semantics = [#tpu.dimension_semantics<parallel>], iteration_bounds = array<i64: 1>, scalar_prefetch = 0 : i64, scratch_operands = 0 : i64, tpu.core_type = #tpu.core_type<tc>, window_params = [{transform_indices = @transform_0, window_bounds = array<i64: 8, 8>}, {transform_indices = @transform_1, window_bounds = array<i64: 8, 8, 4>}, {pipeline_mode = #tpu.pipeline_mode<synchronous>, transform_indices = @transform_2, window_bounds = array<i64: 12, 20>}, {pipeline_mode = #tpu.pipeline_mode<synchronous>, transform_indices = @transform_3, window_bounds = array<i64: 8, 8>}, {transform_indices = @transform_4, window_bounds = array<i64: 8, 1>}]} {
    %c0 = arith.constant 0 : index
    %c0_0 = arith.constant 0 : index
    %0 = vector.load %arg3[%c0, %c0_0] : memref<12x20xf32, #tpu.memory_space<vmem>>, vector<12x20xf32>
    %c0_1 = arith.constant 0 : index
    %c0_2 = arith.constant 0 : index
    %1 = vector.load %arg4[%c0_1, %c0_2] : memref<8x8xf32, #tpu.memory_space<vmem>>, vector<8x8xf32>
    %c0_3 = arith.constant 0 : index
    %c0_4 = arith.constant 0 : index
    %2 = vector.load %arg1[%c0_3, %c0_4] : memref<8x8xf32, #tpu.memory_space<vmem>>, vector<8x8xf32>
    %cst = arith.constant 0.000000e+00 : f32
    %3 = vector.broadcast %cst : f32 to vector<8x12xf32>
    %c0_i32 = arith.constant 0 : i32
    %4 = arith.index_cast %c0_i32 : i32 to index
    %c0_5 = arith.constant 0 : index
    %c0_6 = arith.constant 0 : index
    %5 = vector.load %arg2[%4, %c0_5, %c0_6] : memref<8x8x4xf32, #tpu.memory_space<vmem>>, vector<1x8x4xf32>
    %6 = vector.shape_cast %5 : vector<1x8x4xf32> to vector<8x4xf32>
    %7 = tpu.concatenate %2, %6 in 1 : vector<8x8xf32>, vector<8x4xf32> -> vector<8x12xf32>
    %cst_7 = arith.constant dense<0.000000e+00> : vector<8x20xf32>
    %8 = tpu.matmul %7, %0, %cst_7 {dimension_numbers = #tpu.dot_dimension_numbers<[1], [0], [0], [1], [0, 0, 1, 1], [], []>} : vector<8x12xf32>, vector<12x20xf32>, vector<8x20xf32> -> vector<8x20xf32>
    %9 = vector.extract_strided_slice %8 {offsets = [0, 0], sizes = [8, 8], strides = [1, 1]} : vector<8x20xf32> to vector<8x8xf32>
    %10 = vector.extract_strided_slice %8 {offsets = [0, 8], sizes = [8, 12], strides = [1, 1]} : vector<8x20xf32> to vector<8x12xf32>
    %11 = arith.mulf %7, %10 : vector<8x12xf32>
    %12 = arith.addf %3, %11 : vector<8x12xf32>
    %c1_i32 = arith.constant 1 : i32
    %13 = arith.index_cast %c1_i32 : i32 to index
    %c0_8 = arith.constant 0 : index
    %c0_9 = arith.constant 0 : index
    %14 = vector.load %arg2[%13, %c0_8, %c0_9] : memref<8x8x4xf32, #tpu.memory_space<vmem>>, vector<1x8x4xf32>
    %15 = vector.shape_cast %14 : vector<1x8x4xf32> to vector<8x4xf32>
    %16 = tpu.concatenate %9, %15 in 1 : vector<8x8xf32>, vector<8x4xf32> -> vector<8x12xf32>
    %cst_10 = arith.constant dense<0.000000e+00> : vector<8x20xf32>
    %17 = tpu.matmul %16, %0, %cst_10 {dimension_numbers = #tpu.dot_dimension_numbers<[1], [0], [0], [1], [0, 0, 1, 1], [], []>} : vector<8x12xf32>, vector<12x20xf32>, vector<8x20xf32> -> vector<8x20xf32>
    %18 = vector.extract_strided_slice %17 {offsets = [0, 0], sizes = [8, 8], strides = [1, 1]} : vector<8x20xf32> to vector<8x8xf32>
    %19 = vector.extract_strided_slice %17 {offsets = [0, 8], sizes = [8, 12], strides = [1, 1]} : vector<8x20xf32> to vector<8x12xf32>
    %20 = arith.mulf %16, %19 : vector<8x12xf32>
    %21 = arith.addf %12, %20 : vector<8x12xf32>
    %c2_i32 = arith.constant 2 : i32
    %22 = arith.index_cast %c2_i32 : i32 to index
    %c0_11 = arith.constant 0 : index
    %c0_12 = arith.constant 0 : index
    %23 = vector.load %arg2[%22, %c0_11, %c0_12] : memref<8x8x4xf32, #tpu.memory_space<vmem>>, vector<1x8x4xf32>
    %24 = vector.shape_cast %23 : vector<1x8x4xf32> to vector<8x4xf32>
    %25 = tpu.concatenate %18, %24 in 1 : vector<8x8xf32>, vector<8x4xf32> -> vector<8x12xf32>
    %cst_13 = arith.constant dense<0.000000e+00> : vector<8x20xf32>
    %26 = tpu.matmul %25, %0, %cst_13 {dimension_numbers = #tpu.dot_dimension_numbers<[1], [0], [0], [1], [0, 0, 1, 1], [], []>} : vector<8x12xf32>, vector<12x20xf32>, vector<8x20xf32> -> vector<8x20xf32>
    %27 = vector.extract_strided_slice %26 {offsets = [0, 0], sizes = [8, 8], strides = [1, 1]} : vector<8x20xf32> to vector<8x8xf32>
    %28 = vector.extract_strided_slice %26 {offsets = [0, 8], sizes = [8, 12], strides = [1, 1]} : vector<8x20xf32> to vector<8x12xf32>
    %29 = arith.mulf %25, %28 : vector<8x12xf32>
    %30 = arith.addf %21, %29 : vector<8x12xf32>
    %c3_i32 = arith.constant 3 : i32
    %31 = arith.index_cast %c3_i32 : i32 to index
    %c0_14 = arith.constant 0 : index
    %c0_15 = arith.constant 0 : index
    %32 = vector.load %arg2[%31, %c0_14, %c0_15] : memref<8x8x4xf32, #tpu.memory_space<vmem>>, vector<1x8x4xf32>
    %33 = vector.shape_cast %32 : vector<1x8x4xf32> to vector<8x4xf32>
    %34 = tpu.concatenate %27, %33 in 1 : vector<8x8xf32>, vector<8x4xf32> -> vector<8x12xf32>
    %cst_16 = arith.constant dense<0.000000e+00> : vector<8x20xf32>
    %35 = tpu.matmul %34, %0, %cst_16 {dimension_numbers = #tpu.dot_dimension_numbers<[1], [0], [0], [1], [0, 0, 1, 1], [], []>} : vector<8x12xf32>, vector<12x20xf32>, vector<8x20xf32> -> vector<8x20xf32>
    %36 = vector.extract_strided_slice %35 {offsets = [0, 0], sizes = [8, 8], strides = [1, 1]} : vector<8x20xf32> to vector<8x8xf32>
    %37 = vector.extract_strided_slice %35 {offsets = [0, 8], sizes = [8, 12], strides = [1, 1]} : vector<8x20xf32> to vector<8x12xf32>
    %38 = arith.mulf %34, %37 : vector<8x12xf32>
    %39 = arith.addf %30, %38 : vector<8x12xf32>
    %c4_i32 = arith.constant 4 : i32
    %40 = arith.index_cast %c4_i32 : i32 to index
    %c0_17 = arith.constant 0 : index
    %c0_18 = arith.constant 0 : index
    %41 = vector.load %arg2[%40, %c0_17, %c0_18] : memref<8x8x4xf32, #tpu.memory_space<vmem>>, vector<1x8x4xf32>
    %42 = vector.shape_cast %41 : vector<1x8x4xf32> to vector<8x4xf32>
    %43 = tpu.concatenate %36, %42 in 1 : vector<8x8xf32>, vector<8x4xf32> -> vector<8x12xf32>
    %cst_19 = arith.constant dense<0.000000e+00> : vector<8x20xf32>
    %44 = tpu.matmul %43, %0, %cst_19 {dimension_numbers = #tpu.dot_dimension_numbers<[1], [0], [0], [1], [0, 0, 1, 1], [], []>} : vector<8x12xf32>, vector<12x20xf32>, vector<8x20xf32> -> vector<8x20xf32>
    %45 = vector.extract_strided_slice %44 {offsets = [0, 0], sizes = [8, 8], strides = [1, 1]} : vector<8x20xf32> to vector<8x8xf32>
    %46 = vector.extract_strided_slice %44 {offsets = [0, 8], sizes = [8, 12], strides = [1, 1]} : vector<8x20xf32> to vector<8x12xf32>
    %47 = arith.mulf %43, %46 : vector<8x12xf32>
    %48 = arith.addf %39, %47 : vector<8x12xf32>
    %c5_i32 = arith.constant 5 : i32
    %49 = arith.index_cast %c5_i32 : i32 to index
    %c0_20 = arith.constant 0 : index
    %c0_21 = arith.constant 0 : index
    %50 = vector.load %arg2[%49, %c0_20, %c0_21] : memref<8x8x4xf32, #tpu.memory_space<vmem>>, vector<1x8x4xf32>
    %51 = vector.shape_cast %50 : vector<1x8x4xf32> to vector<8x4xf32>
    %52 = tpu.concatenate %45, %51 in 1 : vector<8x8xf32>, vector<8x4xf32> -> vector<8x12xf32>
    %cst_22 = arith.constant dense<0.000000e+00> : vector<8x20xf32>
    %53 = tpu.matmul %52, %0, %cst_22 {dimension_numbers = #tpu.dot_dimension_numbers<[1], [0], [0], [1], [0, 0, 1, 1], [], []>} : vector<8x12xf32>, vector<12x20xf32>, vector<8x20xf32> -> vector<8x20xf32>
    %54 = vector.extract_strided_slice %53 {offsets = [0, 0], sizes = [8, 8], strides = [1, 1]} : vector<8x20xf32> to vector<8x8xf32>
    %55 = vector.extract_strided_slice %53 {offsets = [0, 8], sizes = [8, 12], strides = [1, 1]} : vector<8x20xf32> to vector<8x12xf32>
    %56 = arith.mulf %52, %55 : vector<8x12xf32>
    %57 = arith.addf %48, %56 : vector<8x12xf32>
    %c6_i32 = arith.constant 6 : i32
    %58 = arith.index_cast %c6_i32 : i32 to index
    %c0_23 = arith.constant 0 : index
    %c0_24 = arith.constant 0 : index
    %59 = vector.load %arg2[%58, %c0_23, %c0_24] : memref<8x8x4xf32, #tpu.memory_space<vmem>>, vector<1x8x4xf32>
    %60 = vector.shape_cast %59 : vector<1x8x4xf32> to vector<8x4xf32>
    %61 = tpu.concatenate %54, %60 in 1 : vector<8x8xf32>, vector<8x4xf32> -> vector<8x12xf32>
    %cst_25 = arith.constant dense<0.000000e+00> : vector<8x20xf32>
    %62 = tpu.matmul %61, %0, %cst_25 {dimension_numbers = #tpu.dot_dimension_numbers<[1], [0], [0], [1], [0, 0, 1, 1], [], []>} : vector<8x12xf32>, vector<12x20xf32>, vector<8x20xf32> -> vector<8x20xf32>
    %63 = vector.extract_strided_slice %62 {offsets = [0, 0], sizes = [8, 8], strides = [1, 1]} : vector<8x20xf32> to vector<8x8xf32>
    %64 = vector.extract_strided_slice %62 {offsets = [0, 8], sizes = [8, 12], strides = [1, 1]} : vector<8x20xf32> to vector<8x12xf32>
    %65 = arith.mulf %61, %64 : vector<8x12xf32>
    %66 = arith.addf %57, %65 : vector<8x12xf32>
    %c7_i32 = arith.constant 7 : i32
    %67 = arith.index_cast %c7_i32 : i32 to index
    %c0_26 = arith.constant 0 : index
    %c0_27 = arith.constant 0 : index
    %68 = vector.load %arg2[%67, %c0_26, %c0_27] : memref<8x8x4xf32, #tpu.memory_space<vmem>>, vector<1x8x4xf32>
    %69 = vector.shape_cast %68 : vector<1x8x4xf32> to vector<8x4xf32>
    %70 = tpu.concatenate %63, %69 in 1 : vector<8x8xf32>, vector<8x4xf32> -> vector<8x12xf32>
    %cst_28 = arith.constant dense<0.000000e+00> : vector<8x20xf32>
    %71 = tpu.matmul %70, %0, %cst_28 {dimension_numbers = #tpu.dot_dimension_numbers<[1], [0], [0], [1], [0, 0, 1, 1], [], []>} : vector<8x12xf32>, vector<12x20xf32>, vector<8x20xf32> -> vector<8x20xf32>
    %72 = vector.extract_strided_slice %71 {offsets = [0, 0], sizes = [8, 8], strides = [1, 1]} : vector<8x20xf32> to vector<8x8xf32>
    %73 = vector.extract_strided_slice %71 {offsets = [0, 8], sizes = [8, 12], strides = [1, 1]} : vector<8x20xf32> to vector<8x12xf32>
    %74 = arith.mulf %70, %73 : vector<8x12xf32>
    %75 = arith.addf %66, %74 : vector<8x12xf32>
    %c8_i32 = arith.constant 8 : i32
    %cst_29 = arith.constant dense<0.000000e+00> : vector<8x8xf32>
    %76 = tpu.matmul %72, %1, %cst_29 {dimension_numbers = #tpu.dot_dimension_numbers<[1], [0], [0], [1], [0, 0, 1, 1], [], []>} : vector<8x8xf32>, vector<8x8xf32>, vector<8x8xf32> -> vector<8x8xf32>
    %cst_30 = arith.constant dense<0.000000e+00> : vector<8xf32>
    %77 = vector.multi_reduction <add>, %75, %cst_30 [1] : vector<8x12xf32> to vector<8xf32>
    %78 = vector.shape_cast %77 : vector<8xf32> to vector<8x1xf32>
    %79 = arith.mulf %76, %72 : vector<8x8xf32>
    %cst_31 = arith.constant dense<0.000000e+00> : vector<8xf32>
    %80 = vector.multi_reduction <add>, %79, %cst_31 [1] : vector<8x8xf32> to vector<8xf32>
    %81 = vector.shape_cast %80 : vector<8xf32> to vector<8x1xf32>
    %82 = arith.addf %78, %81 : vector<8x1xf32>
    %cst_32 = arith.constant 5.000000e-01 : f32
    %83 = vector.broadcast %cst_32 : f32 to vector<8x1xf32>
    %84 = arith.mulf %83, %82 : vector<8x1xf32>
    %c0_33 = arith.constant 0 : index
    %c0_34 = arith.constant 0 : index
    %85 = vector.load %arg5[%c0_33, %c0_34] : memref<8x1xf32, #tpu.memory_space<vmem>>, vector<8x1xf32>
    tpu.vector_store %arg5[%c0_33, %c0_34], %84 {strides = array<i32>} : memref<8x1xf32, #tpu.memory_space<vmem>>, vector<8x1xf32>,
    return
  }
  func.func @transform_0(%arg0: i32) -> (i32, i32) {
    %c0_i32 = arith.constant 0 : i32
    %c0_i32_0 = arith.constant 0 : i32
    return %arg0, %c0_i32 : i32, i32
  }
  func.func @transform_1(%arg0: i32) -> (i32, i32, i32) {
    %c0_i32 = arith.constant 0 : i32
    %c0_i32_0 = arith.constant 0 : i32
    %c0_i32_1 = arith.constant 0 : i32
    return %c0_i32, %arg0, %c0_i32_0 : i32, i32, i32
  }
  func.func @transform_2(%arg0: i32) -> (i32, i32) {
    %c0_i32 = arith.constant 0 : i32
    %c0_i32_0 = arith.constant 0 : i32
    %c0_i32_1 = arith.constant 0 : i32
    return %c0_i32, %c0_i32_0 : i32, i32
  }
  func.func @transform_3(%arg0: i32) -> (i32, i32) {
    %c0_i32 = arith.constant 0 : i32
    %c0_i32_0 = arith.constant 0 : i32
    %c0_i32_1 = arith.constant 0 : i32
    return %c0_i32, %c0_i32_0 : i32, i32
  }
  func.func @transform_4(%arg0: i32) -> (i32, i32) {
    %c0_i32 = arith.constant 0 : i32
    %c0_i32_0 = arith.constant 0 : i32
    return %arg0, %c0_i32 : i32, i32
  }
}

</mosaic_0001>

<llo_original>
// kernel: mpc_forward_pallas.1
$region0: #{mpc_forward_pallas.1}
  #allocation0 [shape = 'u32[]', space=smem, size = 0x4, offset = 0x4, fixed_abs, tag = 'smem constant byte address 0x4 - core index']
  #allocation1 [shape = 'u32[144,128]{1,0:T(1,128)}', space=vmem, size = 0x12000, scoped, tag = 'internal scratch']
  %s0 = inlined_call_operand.vmem [shape: f32[8,8], index: 0, kind: input, shape index: {}]
  %s1 = inlined_call_operand.vmem [shape: f32[8,8,4], index: 1, kind: input, shape index: {}]
  %s2 = inlined_call_operand.vmem [shape: f32[12,20], index: 2, kind: input, shape index: {}]
  %s3 = inlined_call_operand.vmem [shape: f32[8,8], index: 3, kind: input, shape index: {}]
  %s4 = inlined_call_operand.vmem [shape: f32[8,1], index: 4, kind: output, shape index: {}]
  %s5 = sld [smem:[#allocation0]]
  $region26: #{mpc_forward_pallas.1} parent=0
    _
  %s7 = ssub.s32 1, %s5
  %s8 = scalar_select 0, %s7, %s5
  // Predicated region
  $region2: #{mpc_forward_pallas.1} parent=0 // pred_check
    _
  $region3: #{mpc_forward_pallas.1} parent=0 // pred_check_branch
    %10 = sbr.rel (0) target = $region5
  $region4: #{mpc_forward_pallas.1} parent=0 // pred_region
    _
  $region5: #{mpc_forward_pallas.1} parent=0 // pred_fallthru
    _
  // Predicated region
  $region6: #{mpc_forward_pallas.1} parent=0 // pred_check
    _
  $region7: #{mpc_forward_pallas.1} parent=0 // pred_check_branch
    %12 = sbr.rel (0) target = $region9
  $region8: #{mpc_forward_pallas.1} parent=0 // pred_region
    _
  $region9: #{mpc_forward_pallas.1} parent=0 // pred_fallthru
    _
  // Predicated region
  $region10: #{mpc_forward_pallas.1} parent=0 // pred_check
    _
  $region11: #{mpc_forward_pallas.1} parent=0 // pred_check_branch
    %14 = sbr.rel (0) target = $region13
  $region12: #{mpc_forward_pallas.1} parent=0 // pred_region
    _
  $region13: #{mpc_forward_pallas.1} parent=0 // pred_fallthru
    _
  // Predicated region
  $region14: #{mpc_forward_pallas.1} parent=0 // pred_check
    _
  $region15: #{mpc_forward_pallas.1} parent=0 // pred_check_branch
    %16 = sbr.rel (0) target = $region17
  $region16: #{mpc_forward_pallas.1} parent=0 // pred_region
    _
  $region17: #{mpc_forward_pallas.1} parent=0 // pred_fallthru
    _
  %v17 = vld [vmem:[%s2] sm:$0xff]
  %v18 = vld [vmem:[%s2 + $0x8] sm:$0xf]
  %v19 = vld [vmem:[%s3] sm:$0xff]
  %v20 = vld [vmem:[%s0] sm:$0xff]
  %v21 = vld [vmem:[%s1] sm:$0xff]
  %23 = vrot.lane.b32.xlu0 %v21, 8
  %v24 = vpop.permute.xlu0 %23
  %vm26 = vcmask 64512
  %v27 = vsel %vm26, %v20, %v24
  %vm28 = vcmask 97280
  %v30 = vsel %vm28, %v27, 0
  %vm32 = vcmask 1043456
  %v34 = vsel %vm32, %v18, 0
  %36 = vmatprep.subr.mxu0 0.0
  %37 = vmatpush1.msra.mxu0 0.0
  %38 = vmatprep.subr.mxu0 0.0
  %39 = vmatpush1.msra.mxu0 0.0
  %40 = vmatprep.subr.mxu0 0.0
  %41 = vmatpush1.msra.mxu0 0.0
  %42 = vmatprep.subr.mxu0 0.0
  %43 = vmatpush1.msra.mxu0 0.0
  %44 = vmatprep.subr.mxu0 0.0
  %45 = vmatpush1.msra.mxu0 0.0
  %46 = vmatprep.subr.mxu0 0.0
  %47 = vmatpush1.msra.mxu0 0.0
  %48 = vmatprep.subr.mxu0 0.0
  %49 = vmatpush1.msra.mxu0 0.0
  %50 = vmatprep.subr.mxu0 0.0
  %51 = vmatpush1.msra.mxu0 0.0
  %52 = vmatprep.subr.mxu0 0.0
  %53 = vmatpush1.msra.mxu0 0.0
  %54 = vmatprep.subr.mxu0 0.0
  %55 = vmatpush1.msra.mxu0 0.0
  %56 = vmatprep.subr.mxu0 0.0
  %57 = vmatpush1.msra.mxu0 0.0
  %58 = vmatprep.subr.mxu0 0.0
  %59 = vmatpush1.msra.mxu0 0.0
  %60 = vmatprep.subr.mxu0 0.0
  %61 = vmatpush1.msra.mxu0 0.0
  %62 = vmatprep.subr.mxu0 0.0
  %63 = vmatpush1.msra.mxu0 0.0
  %64 = vmatprep.subr.mxu0 0.0
  %65 = vmatpush1.msra.mxu0 %v34
  %66 = vmatprep.subr.mxu0 0.0
  %67 = vmatpush1.msra.mxu0 %v17
  %68 = vmatprep.subr.mxu0 0.0
  %69 = vmatpush2.msra.mxu0 0.0
  %70 = vmatprep.subr.mxu0 0.0
  %71 = vmatpush2.msra.mxu0 0.0
  %72 = vmatprep.subr.mxu0 0.0
  %73 = vmatpush2.msra.mxu0 0.0
  %74 = vmatprep.subr.mxu0 0.0
  %75 = vmatpush2.msra.mxu0 0.0
  %76 = vmatprep.subr.mxu0 0.0
  %77 = vmatpush2.msra.mxu0 0.0
  %78 = vmatprep.subr.mxu0 0.0
  %79 = vmatpush2.msra.mxu0 0.0
  %80 = vmatprep.subr.mxu0 0.0
  %81 = vmatpush2.msra.mxu0 0.0
  %82 = vmatprep.subr.mxu0 0.0
  %83 = vmatpush2.msra.mxu0 0.0
  %84 = vmatprep.subr.mxu0 0.0
  %85 = vmatpush2.msra.mxu0 0.0
  %86 = vmatprep.subr.mxu0 0.0
  %87 = vmatpush2.msra.mxu0 0.0
  %88 = vmatprep.subr.mxu0 0.0
  %89 = vmatpush2.msra.mxu0 0.0
  %90 = vmatprep.subr.mxu0 0.0
  %91 = vmatpush2.msra.mxu0 0.0
  %92 = vmatprep.subr.mxu0 0.0
  %93 = vmatpush2.msra.mxu0 0.0
  %94 = vmatprep.subr.mxu0 0.0
  %95 = vmatpush2.msra.mxu0 0.0
  %96 = vmatprep.subr.mxu0 0.0
  %97 = vmatpush2.msra.mxu0 0.0
  %98 = vmatprep.subr.mxu0 0.0
  %99 = vmatpush2.msra.mxu0 0.0
  %100 = vmatprep.mubr.f32.mxu0 0.0
  %101 = vmatmul.mubr.f32.gmra.mxu0 %v30
  %v102 = vpop.f32.mrf.mxu0
  %v103 = vadd.f32 0.0, %v102
  %v104 = vpop.f32.mrf.mxu0
  %105 = vdwg.mxu0
  %107 = vrot.lane.b32.xlu0 %v103, 120
  %v108 = vpop.permute.xlu0 %107
  %v110 = vmul.f32 %v27, %v108
  %v111 = vadd.f32 %v110, 0.0
  %s112 = scalar_lea.vmem %s1, 8
  %v113 = vld [vmem:[%s112] sm:$0xff]
  %115 = vrot.lane.b32.xlu0 %v113, 8
  %v116 = vpop.permute.xlu0 %115
  %v118 = vsel %vm26, %v103, %v116
  %v120 = vsel %vm28, %v118, 0
  %122 = vmatprep.subr.mxu0 0.0
  %123 = vmatpush1.msra.mxu0 0.0
  %124 = vmatprep.subr.mxu0 0.0
  %125 = vmatpush1.msra.mxu0 0.0
  %126 = vmatprep.subr.mxu0 0.0
  %127 = vmatpush1.msra.mxu0 0.0
  %128 = vmatprep.subr.mxu0 0.0
  %129 = vmatpush1.msra.mxu0 0.0
  %130 = vmatprep.subr.mxu0 0.0
  %131 = vmatpush1.msra.mxu0 0.0
  %132 = vmatprep.subr.mxu0 0.0
  %133 = vmatpush1.msra.mxu0 0.0
  %134 = vmatprep.subr.mxu0 0.0
  %135 = vmatpush1.msra.mxu0 0.0
  %136 = vmatprep.subr.mxu0 0.0
  %137 = vmatpush1.msra.mxu0 0.0
  %138 = vmatprep.subr.mxu0 0.0
  %139 = vmatpush1.msra.mxu0 0.0
  %140 = vmatprep.subr.mxu0 0.0
  %141 = vmatpush1.msra.mxu0 0.0
  %142 = vmatprep.subr.mxu0 0.0
  %143 = vmatpush1.msra.mxu0 0.0
  %144 = vmatprep.subr.mxu0 0.0
  %145 = vmatpush1.msra.mxu0 0.0
  %146 = vmatprep.subr.mxu0 0.0
  %147 = vmatpush1.msra.mxu0 0.0
  %148 = vmatprep.subr.mxu0 0.0
  %149 = vmatpush1.msra.mxu0 0.0
  %150 = vmatprep.subr.mxu0 0.0
  %151 = vmatpush1.msra.mxu0 %v34
  %152 = vmatprep.subr.mxu0 0.0
  %153 = vmatpush1.msra.mxu0 %v17
  %154 = vmatprep.subr.mxu0 0.0
  %155 = vmatpush2.msra.mxu0 0.0
  %156 = vmatprep.subr.mxu0 0.0
  %157 = vmatpush2.msra.mxu0 0.0
  %158 = vmatprep.subr.mxu0 0.0
  %159 = vmatpush2.msra.mxu0 0.0
  %160 = vmatprep.subr.mxu0 0.0
  %161 = vmatpush2.msra.mxu0 0.0
  %162 = vmatprep.subr.mxu0 0.0
  %163 = vmatpush2.msra.mxu0 0.0
  %164 = vmatprep.subr.mxu0 0.0
  %165 = vmatpush2.msra.mxu0 0.0
  %166 = vmatprep.subr.mxu0 0.0
  %167 = vmatpush2.msra.mxu0 0.0
  %168 = vmatprep.subr.mxu0 0.0
  %169 = vmatpush2.msra.mxu0 0.0
  %170 = vmatprep.subr.mxu0 0.0
  %171 = vmatpush2.msra.mxu0 0.0
  %172 = vmatprep.subr.mxu0 0.0
  %173 = vmatpush2.msra.mxu0 0.0
  %174 = vmatprep.subr.mxu0 0.0
  %175 = vmatpush2.msra.mxu0 0.0
  %176 = vmatprep.subr.mxu0 0.0
  %177 = vmatpush2.msra.mxu0 0.0
  %178 = vmatprep.subr.mxu0 0.0
  %179 = vmatpush2.msra.mxu0 0.0
  %180 = vmatprep.subr.mxu0 0.0
  %181 = vmatpush2.msra.mxu0 0.0
  %182 = vmatprep.subr.mxu0 0.0
  %183 = vmatpush2.msra.mxu0 0.0
  %184 = vmatprep.subr.mxu0 0.0
  %185 = vmatpush2.msra.mxu0 0.0
  %186 = vmatprep.mubr.f32.mxu0 0.0
  %187 = vmatmul.mubr.f32.gmra.mxu0 %v120
  %v188 = vpop.f32.mrf.mxu0
  %v189 = vadd.f32 0.0, %v188
  %v190 = vpop.f32.mrf.mxu0
  %191 = vdwg.mxu0
  %193 = vrot.lane.b32.xlu0 %v189, 120
  %v194 = vpop.permute.xlu0 %193
  %v196 = vmul.f32 %v118, %v194
  %v197 = vadd.f32 %v111, %v196
  %s198 = scalar_lea.vmem %s1, 16
  %v199 = vld [vmem:[%s198] sm:$0xff]
  %201 = vrot.lane.b32.xlu0 %v199, 8
  %v202 = vpop.permute.xlu0 %201
  %v204 = vsel %vm26, %v189, %v202
  %v206 = vsel %vm28, %v204, 0
  %208 = vmatprep.subr.mxu0 0.0
  %209 = vmatpush1.msra.mxu0 0.0
  %210 = vmatprep.subr.mxu0 0.0
  %211 = vmatpush1.msra.mxu0 0.0
  %212 = vmatprep.subr.mxu0 0.0
  %213 = vmatpush1.msra.mxu0 0.0
  %214 = vmatprep.subr.mxu0 0.0
  %215 = vmatpush1.msra.mxu0 0.0
  %216 = vmatprep.subr.mxu0 0.0
  %217 = vmatpush1.msra.mxu0 0.0
  %218 = vmatprep.subr.mxu0 0.0
  %219 = vmatpush1.msra.mxu0 0.0
  %220 = vmatprep.subr.mxu0 0.0
  %221 = vmatpush1.msra.mxu0 0.0
  %222 = vmatprep.subr.mxu0 0.0
  %223 = vmatpush1.msra.mxu0 0.0
  %224 = vmatprep.subr.mxu0 0.0
  %225 = vmatpush1.msra.mxu0 0.0
  %226 = vmatprep.subr.mxu0 0.0
  %227 = vmatpush1.msra.mxu0 0.0
  %228 = vmatprep.subr.mxu0 0.0
  %229 = vmatpush1.msra.mxu0 0.0
  %230 = vmatprep.subr.mxu0 0.0
  %231 = vmatpush1.msra.mxu0 0.0
  %232 = vmatprep.subr.mxu0 0.0
  %233 = vmatpush1.msra.mxu0 0.0
  %234 = vmatprep.subr.mxu0 0.0
  %235 = vmatpush1.msra.mxu0 0.0
  %236 = vmatprep.subr.mxu0 0.0
  %237 = vmatpush1.msra.mxu0 %v34
  %238 = vmatprep.subr.mxu0 0.0
  %239 = vmatpush1.msra.mxu0 %v17
  %240 = vmatprep.subr.mxu0 0.0
  %241 = vmatpush2.msra.mxu0 0.0
  %242 = vmatprep.subr.mxu0 0.0
  %243 = vmatpush2.msra.mxu0 0.0
  %244 = vmatprep.subr.mxu0 0.0
  %245 = vmatpush2.msra.mxu0 0.0
  %246 = vmatprep.subr.mxu0 0.0
  %247 = vmatpush2.msra.mxu0 0.0
  %248 = vmatprep.subr.mxu0 0.0
  %249 = vmatpush2.msra.mxu0 0.0
  %250 = vmatprep.subr.mxu0 0.0
  %251 = vmatpush2.msra.mxu0 0.0
  %252 = vmatprep.subr.mxu0 0.0
  %253 = vmatpush2.msra.mxu0 0.0
  %254 = vmatprep.subr.mxu0 0.0
  %255 = vmatpush2.msra.mxu0 0.0
  %256 = vmatprep.subr.mxu0 0.0
  %257 = vmatpush2.msra.mxu0 0.0
  %258 = vmatprep.subr.mxu0 0.0
  %259 = vmatpush2.msra.mxu0 0.0
  %260 = vmatprep.subr.mxu0 0.0
  %261 = vmatpush2.msra.mxu0 0.0
  %262 = vmatprep.subr.mxu0 0.0
  %263 = vmatpush2.msra.mxu0 0.0
  %264 = vmatprep.subr.mxu0 0.0
  %265 = vmatpush2.msra.mxu0 0.0
  %266 = vmatprep.subr.mxu0 0.0
  %267 = vmatpush2.msra.mxu0 0.0
  %268 = vmatprep.subr.mxu0 0.0
  %269 = vmatpush2.msra.mxu0 0.0
  %270 = vmatprep.subr.mxu0 0.0
  %271 = vmatpush2.msra.mxu0 0.0
  %272 = vmatprep.mubr.f32.mxu0 0.0
  %273 = vmatmul.mubr.f32.gmra.mxu0 %v206
  %v274 = vpop.f32.mrf.mxu0
  %v275 = vadd.f32 0.0, %v274
  %v276 = vpop.f32.mrf.mxu0
  %277 = vdwg.mxu0
  %279 = vrot.lane.b32.xlu0 %v275, 120
  %v280 = vpop.permute.xlu0 %279
  %v282 = vmul.f32 %v204, %v280
  %v283 = vadd.f32 %v197, %v282
  %s284 = scalar_lea.vmem %s1, 24
  %v285 = vld [vmem:[%s284] sm:$0xff]
  %287 = vrot.lane.b32.xlu0 %v285, 8
  %v288 = vpop.permute.xlu0 %287
  %v290 = vsel %vm26, %v275, %v288
  %v292 = vsel %vm28, %v290, 0
  %294 = vmatprep.subr.mxu0 0.0
  %295 = vmatpush1.msra.mxu0 0.0
  %296 = vmatprep.subr.mxu0 0.0
  %297 = vmatpush1.msra.mxu0 0.0
  %298 = vmatprep.subr.mxu0 0.0
  %299 = vmatpush1.msra.mxu0 0.0
  %300 = vmatprep.subr.mxu0 0.0
  %301 = vmatpush1.msra.mxu0 0.0
  %302 = vmatprep.subr.mxu0 0.0
  %303 = vmatpush1.msra.mxu0 0.0
  %304 = vmatprep.subr.mxu0 0.0
  %305 = vmatpush1.msra.mxu0 0.0
  %306 = vmatprep.subr.mxu0 0.0
  %307 = vmatpush1.msra.mxu0 0.0
  %308 = vmatprep.subr.mxu0 0.0
  %309 = vmatpush1.msra.mxu0 0.0
  %310 = vmatprep.subr.mxu0 0.0
  %311 = vmatpush1.msra.mxu0 0.0
  %312 = vmatprep.subr.mxu0 0.0
  %313 = vmatpush1.msra.mxu0 0.0
  %314 = vmatprep.subr.mxu0 0.0
  %315 = vmatpush1.msra.mxu0 0.0
  %316 = vmatprep.subr.mxu0 0.0
  %317 = vmatpush1.msra.mxu0 0.0
  %318 = vmatprep.subr.mxu0 0.0
  %319 = vmatpush1.msra.mxu0 0.0
  %320 = vmatprep.subr.mxu0 0.0
  %321 = vmatpush1.msra.mxu0 0.0
  %322 = vmatprep.subr.mxu0 0.0
  %323 = vmatpush1.msra.mxu0 %v34
  %324 = vmatprep.subr.mxu0 0.0
  %325 = vmatpush1.msra.mxu0 %v17
  %326 = vmatprep.subr.mxu0 0.0
  %327 = vmatpush2.msra.mxu0 0.0
  %328 = vmatprep.subr.mxu0 0.0
  %329 = vmatpush2.msra.mxu0 0.0
  %330 = vmatprep.subr.mxu0 0.0
  %331 = vmatpush2.msra.mxu0 0.0
  %332 = vmatprep.subr.mxu0 0.0
  %333 = vmatpush2.msra.mxu0 0.0
  %334 = vmatprep.subr.mxu0 0.0
  %335 = vmatpush2.msra.mxu0 0.0
  %336 = vmatprep.subr.mxu0 0.0
  %337 = vmatpush2.msra.mxu0 0.0
  %338 = vmatprep.subr.mxu0 0.0
  %339 = vmatpush2.msra.mxu0 0.0
  %340 = vmatprep.subr.mxu0 0.0
  %341 = vmatpush2.msra.mxu0 0.0
  %342 = vmatprep.subr.mxu0 0.0
  %343 = vmatpush2.msra.mxu0 0.0
  %344 = vmatprep.subr.mxu0 0.0
  %345 = vmatpush2.msra.mxu0 0.0
  %346 = vmatprep.subr.mxu0 0.0
  %347 = vmatpush2.msra.mxu0 0.0
  %348 = vmatprep.subr.mxu0 0.0
  %349 = vmatpush2.msra.mxu0 0.0
  %350 = vmatprep.subr.mxu0 0.0
  %351 = vmatpush2.msra.mxu0 0.0
  %352 = vmatprep.subr.mxu0 0.0
  %353 = vmatpush2.msra.mxu0 0.0
  %354 = vmatprep.subr.mxu0 0.0
  %355 = vmatpush2.msra.mxu0 0.0
  %356 = vmatprep.subr.mxu0 0.0
  %357 = vmatpush2.msra.mxu0 0.0
  %358 = vmatprep.mubr.f32.mxu0 0.0
  %359 = vmatmul.mubr.f32.gmra.mxu0 %v292
  %v360 = vpop.f32.mrf.mxu0
  %v361 = vadd.f32 0.0, %v360
  %v362 = vpop.f32.mrf.mxu0
  %363 = vdwg.mxu0
  %365 = vrot.lane.b32.xlu0 %v361, 120
  %v366 = vpop.permute.xlu0 %365
  %v368 = vmul.f32 %v290, %v366
  %v369 = vadd.f32 %v283, %v368
  %s370 = scalar_lea.vmem %s1, 32
  %v371 = vld [vmem:[%s370] sm:$0xff]
  %373 = vrot.lane.b32.xlu0 %v371, 8
  %v374 = vpop.permute.xlu0 %373
  %v376 = vsel %vm26, %v361, %v374
  %v378 = vsel %vm28, %v376, 0
  %380 = vmatprep.subr.mxu0 0.0
  %381 = vmatpush1.msra.mxu0 0.0
  %382 = vmatprep.subr.mxu0 0.0
  %383 = vmatpush1.msra.mxu0 0.0
  %384 = vmatprep.subr.mxu0 0.0
  %385 = vmatpush1.msra.mxu0 0.0
  %386 = vmatprep.subr.mxu0 0.0
  %387 = vmatpush1.msra.mxu0 0.0
  %388 = vmatprep.subr.mxu0 0.0
  %389 = vmatpush1.msra.mxu0 0.0
  %390 = vmatprep.subr.mxu0 0.0
  %391 = vmatpush1.msra.mxu0 0.0
  %392 = vmatprep.subr.mxu0 0.0
  %393 = vmatpush1.msra.mxu0 0.0
  %394 = vmatprep.subr.mxu0 0.0
  %395 = vmatpush1.msra.mxu0 0.0
  %396 = vmatprep.subr.mxu0 0.0
  %397 = vmatpush1.msra.mxu0 0.0
  %398 = vmatprep.subr.mxu0 0.0
  %399 = vmatpush1.msra.mxu0 0.0
  %400 = vmatprep.subr.mxu0 0.0
  %401 = vmatpush1.msra.mxu0 0.0
  %402 = vmatprep.subr.mxu0 0.0
  %403 = vmatpush1.msra.mxu0 0.0
  %404 = vmatprep.subr.mxu0 0.0
  %405 = vmatpush1.msra.mxu0 0.0
  %406 = vmatprep.subr.mxu0 0.0
  %407 = vmatpush1.msra.mxu0 0.0
  %408 = vmatprep.subr.mxu0 0.0
  %409 = vmatpush1.msra.mxu0 %v34
  %410 = vmatprep.subr.mxu0 0.0
  %411 = vmatpush1.msra.mxu0 %v17
  %412 = vmatprep.subr.mxu0 0.0
  %413 = vmatpush2.msra.mxu0 0.0
  %414 = vmatprep.subr.mxu0 0.0
  %415 = vmatpush2.msra.mxu0 0.0
  %416 = vmatprep.subr.mxu0 0.0
  %417 = vmatpush2.msra.mxu0 0.0
  %418 = vmatprep.subr.mxu0 0.0
  %419 = vmatpush2.msra.mxu0 0.0
  %420 = vmatprep.subr.mxu0 0.0
  %421 = vmatpush2.msra.mxu0 0.0
  %422 = vmatprep.subr.mxu0 0.0
  %423 = vmatpush2.msra.mxu0 0.0
  %424 = vmatprep.subr.mxu0 0.0
  %425 = vmatpush2.msra.mxu0 0.0
  %426 = vmatprep.subr.mxu0 0.0
  %427 = vmatpush2.msra.mxu0 0.0
  %428 = vmatprep.subr.mxu0 0.0
  %429 = vmatpush2.msra.mxu0 0.0
  %430 = vmatprep.subr.mxu0 0.0
  %431 = vmatpush2.msra.mxu0 0.0
  %432 = vmatprep.subr.mxu0 0.0
  %433 = vmatpush2.msra.mxu0 0.0
  %434 = vmatprep.subr.mxu0 0.0
  %435 = vmatpush2.msra.mxu0 0.0
  %436 = vmatprep.subr.mxu0 0.0
  %437 = vmatpush2.msra.mxu0 0.0
  %438 = vmatprep.subr.mxu0 0.0
  %439 = vmatpush2.msra.mxu0 0.0
  %440 = vmatprep.subr.mxu0 0.0
  %441 = vmatpush2.msra.mxu0 0.0
  %442 = vmatprep.subr.mxu0 0.0
  %443 = vmatpush2.msra.mxu0 0.0
  %444 = vmatprep.mubr.f32.mxu0 0.0
  %445 = vmatmul.mubr.f32.gmra.mxu0 %v378
  %v446 = vpop.f32.mrf.mxu0
  %v447 = vadd.f32 0.0, %v446
  %v448 = vpop.f32.mrf.mxu0
  %449 = vdwg.mxu0
  %451 = vrot.lane.b32.xlu0 %v447, 120
  %v452 = vpop.permute.xlu0 %451
  %v454 = vmul.f32 %v376, %v452
  %v455 = vadd.f32 %v369, %v454
  %s456 = scalar_lea.vmem %s1, 40
  %v457 = vld [vmem:[%s456] sm:$0xff]
  %459 = vrot.lane.b32.xlu0 %v457, 8
  %v460 = vpop.permute.xlu0 %459
  %v462 = vsel %vm26, %v447, %v460
  %v464 = vsel %vm28, %v462, 0
  %466 = vmatprep.subr.mxu0 0.0
  %467 = vmatpush1.msra.mxu0 0.0
  %468 = vmatprep.subr.mxu0 0.0
  %469 = vmatpush1.msra.mxu0 0.0
  %470 = vmatprep.subr.mxu0 0.0
  %471 = vmatpush1.msra.mxu0 0.0
  %472 = vmatprep.subr.mxu0 0.0
  %473 = vmatpush1.msra.mxu0 0.0
  %474 = vmatprep.subr.mxu0 0.0
  %475 = vmatpush1.msra.mxu0 0.0
  %476 = vmatprep.subr.mxu0 0.0
  %477 = vmatpush1.msra.mxu0 0.0
  %478 = vmatprep.subr.mxu0 0.0
  %479 = vmatpush1.msra.mxu0 0.0
  %480 = vmatprep.subr.mxu0 0.0
  %481 = vmatpush1.msra.mxu0 0.0
  %482 = vmatprep.subr.mxu0 0.0
  %483 = vmatpush1.msra.mxu0 0.0
  %484 = vmatprep.subr.mxu0 0.0
  %485 = vmatpush1.msra.mxu0 0.0
  %486 = vmatprep.subr.mxu0 0.0
  %487 = vmatpush1.msra.mxu0 0.0
  %488 = vmatprep.subr.mxu0 0.0
  %489 = vmatpush1.msra.mxu0 0.0
  %490 = vmatprep.subr.mxu0 0.0
  %491 = vmatpush1.msra.mxu0 0.0
  %492 = vmatprep.subr.mxu0 0.0
  %493 = vmatpush1.msra.mxu0 0.0
  %494 = vmatprep.subr.mxu0 0.0
  %495 = vmatpush1.msra.mxu0 %v34
  %496 = vmatprep.subr.mxu0 0.0
  %497 = vmatpush1.msra.mxu0 %v17
  %498 = vmatprep.subr.mxu0 0.0
  %499 = vmatpush2.msra.mxu0 0.0
  %500 = vmatprep.subr.mxu0 0.0
  %501 = vmatpush2.msra.mxu0 0.0
  %502 = vmatprep.subr.mxu0 0.0
  %503 = vmatpush2.msra.mxu0 0.0
  %504 = vmatprep.subr.mxu0 0.0
  %505 = vmatpush2.msra.mxu0 0.0
  %506 = vmatprep.subr.mxu0 0.0
  %507 = vmatpush2.msra.mxu0 0.0
  %508 = vmatprep.subr.mxu0 0.0
  %509 = vmatpush2.msra.mxu0 0.0
  %510 = vmatprep.subr.mxu0 0.0
  %511 = vmatpush2.msra.mxu0 0.0
  %512 = vmatprep.subr.mxu0 0.0
  %513 = vmatpush2.msra.mxu0 0.0
  %514 = vmatprep.subr.mxu0 0.0
  %515 = vmatpush2.msra.mxu0 0.0
  %516 = vmatprep.subr.mxu0 0.0
  %517 = vmatpush2.msra.mxu0 0.0
  %518 = vmatprep.subr.mxu0 0.0
  %519 = vmatpush2.msra.mxu0 0.0
  %520 = vmatprep.subr.mxu0 0.0
  %521 = vmatpush2.msra.mxu0 0.0
  %522 = vmatprep.subr.mxu0 0.0
  %523 = vmatpush2.msra.mxu0 0.0
  %524 = vmatprep.subr.mxu0 0.0
  %525 = vmatpush2.msra.mxu0 0.0
  %526 = vmatprep.subr.mxu0 0.0
  %527 = vmatpush2.msra.mxu0 0.0
  %528 = vmatprep.subr.mxu0 0.0
  %529 = vmatpush2.msra.mxu0 0.0
  %530 = vmatprep.mubr.f32.mxu0 0.0
  %531 = vmatmul.mubr.f32.gmra.mxu0 %v464
  %v532 = vpop.f32.mrf.mxu0
  %v533 = vadd.f32 0.0, %v532
  %v534 = vpop.f32.mrf.mxu0
  %535 = vdwg.mxu0
  %537 = vrot.lane.b32.xlu0 %v533, 120
  %v538 = vpop.permute.xlu0 %537
  %v540 = vmul.f32 %v462, %v538
  %v541 = vadd.f32 %v455, %v540
  %s542 = scalar_lea.vmem %s1, 48
  %v543 = vld [vmem:[%s542] sm:$0xff]
  %545 = vrot.lane.b32.xlu0 %v543, 8
  %v546 = vpop.permute.xlu0 %545
  %v548 = vsel %vm26, %v533, %v546
  %v550 = vsel %vm28, %v548, 0
  %552 = vmatprep.subr.mxu0 0.0
  %553 = vmatpush1.msra.mxu0 0.0
  %554 = vmatprep.subr.mxu0 0.0
  %555 = vmatpush1.msra.mxu0 0.0
  %556 = vmatprep.subr.mxu0 0.0
  %557 = vmatpush1.msra.mxu0 0.0
  %558 = vmatprep.subr.mxu0 0.0
  %559 = vmatpush1.msra.mxu0 0.0
  %560 = vmatprep.subr.mxu0 0.0
  %561 = vmatpush1.msra.mxu0 0.0
  %562 = vmatprep.subr.mxu0 0.0
  %563 = vmatpush1.msra.mxu0 0.0
  %564 = vmatprep.subr.mxu0 0.0
  %565 = vmatpush1.msra.mxu0 0.0
  %566 = vmatprep.subr.mxu0 0.0
  %567 = vmatpush1.msra.mxu0 0.0
  %568 = vmatprep.subr.mxu0 0.0
  %569 = vmatpush1.msra.mxu0 0.0
  %570 = vmatprep.subr.mxu0 0.0
  %571 = vmatpush1.msra.mxu0 0.0
  %572 = vmatprep.subr.mxu0 0.0
  %573 = vmatpush1.msra.mxu0 0.0
  %574 = vmatprep.subr.mxu0 0.0
  %575 = vmatpush1.msra.mxu0 0.0
  %576 = vmatprep.subr.mxu0 0.0
  %577 = vmatpush1.msra.mxu0 0.0
  %578 = vmatprep.subr.mxu0 0.0
  %579 = vmatpush1.msra.mxu0 0.0
  %580 = vmatprep.subr.mxu0 0.0
  %581 = vmatpush1.msra.mxu0 %v34
  %582 = vmatprep.subr.mxu0 0.0
  %583 = vmatpush1.msra.mxu0 %v17
  %584 = vmatprep.subr.mxu0 0.0
  %585 = vmatpush2.msra.mxu0 0.0
  %586 = vmatprep.subr.mxu0 0.0
  %587 = vmatpush2.msra.mxu0 0.0
  %588 = vmatprep.subr.mxu0 0.0
  %589 = vmatpush2.msra.mxu0 0.0
  %590 = vmatprep.subr.mxu0 0.0
  %591 = vmatpush2.msra.mxu0 0.0
  %592 = vmatprep.subr.mxu0 0.0
  %593 = vmatpush2.msra.mxu0 0.0
  %594 = vmatprep.subr.mxu0 0.0
  %595 = vmatpush2.msra.mxu0 0.0
  %596 = vmatprep.subr.mxu0 0.0
  %597 = vmatpush2.msra.mxu0 0.0
  %598 = vmatprep.subr.mxu0 0.0
  %599 = vmatpush2.msra.mxu0 0.0
  %600 = vmatprep.subr.mxu0 0.0
  %601 = vmatpush2.msra.mxu0 0.0
  %602 = vmatprep.subr.mxu0 0.0
  %603 = vmatpush2.msra.mxu0 0.0
  %604 = vmatprep.subr.mxu0 0.0
  %605 = vmatpush2.msra.mxu0 0.0
  %606 = vmatprep.subr.mxu0 0.0
  %607 = vmatpush2.msra.mxu0 0.0
  %608 = vmatprep.subr.mxu0 0.0
  %609 = vmatpush2.msra.mxu0 0.0
  %610 = vmatprep.subr.mxu0 0.0
  %611 = vmatpush2.msra.mxu0 0.0
  %612 = vmatprep.subr.mxu0 0.0
  %613 = vmatpush2.msra.mxu0 0.0
  %614 = vmatprep.subr.mxu0 0.0
  %615 = vmatpush2.msra.mxu0 0.0
  %616 = vmatprep.mubr.f32.mxu0 0.0
  %617 = vmatmul.mubr.f32.gmra.mxu0 %v550
  %v618 = vpop.f32.mrf.mxu0
  %v619 = vadd.f32 0.0, %v618
  %v620 = vpop.f32.mrf.mxu0
  %621 = vdwg.mxu0
  %623 = vrot.lane.b32.xlu0 %v619, 120
  %v624 = vpop.permute.xlu0 %623
  %v626 = vmul.f32 %v548, %v624
  %v627 = vadd.f32 %v541, %v626
  %s628 = scalar_lea.vmem %s1, 56
  %v629 = vld [vmem:[%s628] sm:$0xff]
  %631 = vrot.lane.b32.xlu0 %v629, 8
  %v632 = vpop.permute.xlu0 %631
  %v634 = vsel %vm26, %v619, %v632
  %v636 = vsel %vm28, %v634, 0
  %638 = vmatprep.subr.mxu0 0.0
  %639 = vmatpush1.msra.mxu0 0.0
  %640 = vmatprep.subr.mxu0 0.0
  %641 = vmatpush1.msra.mxu0 0.0
  %642 = vmatprep.subr.mxu0 0.0
  %643 = vmatpush1.msra.mxu0 0.0
  %644 = vmatprep.subr.mxu0 0.0
  %645 = vmatpush1.msra.mxu0 0.0
  %646 = vmatprep.subr.mxu0 0.0
  %647 = vmatpush1.msra.mxu0 0.0
  %648 = vmatprep.subr.mxu0 0.0
  %649 = vmatpush1.msra.mxu0 0.0
  %650 = vmatprep.subr.mxu0 0.0
  %651 = vmatpush1.msra.mxu0 0.0
  %652 = vmatprep.subr.mxu0 0.0
  %653 = vmatpush1.msra.mxu0 0.0
  %654 = vmatprep.subr.mxu0 0.0
  %655 = vmatpush1.msra.mxu0 0.0
  %656 = vmatprep.subr.mxu0 0.0
  %657 = vmatpush1.msra.mxu0 0.0
  %658 = vmatprep.subr.mxu0 0.0
  %659 = vmatpush1.msra.mxu0 0.0
  %660 = vmatprep.subr.mxu0 0.0
  %661 = vmatpush1.msra.mxu0 0.0
  %662 = vmatprep.subr.mxu0 0.0
  %663 = vmatpush1.msra.mxu0 0.0
  %664 = vmatprep.subr.mxu0 0.0
  %665 = vmatpush1.msra.mxu0 0.0
  %666 = vmatprep.subr.mxu0 0.0
  %667 = vmatpush1.msra.mxu0 %v34
  %668 = vmatprep.subr.mxu0 0.0
  %669 = vmatpush1.msra.mxu0 %v17
  %670 = vmatprep.subr.mxu0 0.0
  %671 = vmatpush2.msra.mxu0 0.0
  %672 = vmatprep.subr.mxu0 0.0
  %673 = vmatpush2.msra.mxu0 0.0
  %674 = vmatprep.subr.mxu0 0.0
  %675 = vmatpush2.msra.mxu0 0.0
  %676 = vmatprep.subr.mxu0 0.0
  %677 = vmatpush2.msra.mxu0 0.0
  %678 = vmatprep.subr.mxu0 0.0
  %679 = vmatpush2.msra.mxu0 0.0
  %680 = vmatprep.subr.mxu0 0.0
  %681 = vmatpush2.msra.mxu0 0.0
  %682 = vmatprep.subr.mxu0 0.0
  %683 = vmatpush2.msra.mxu0 0.0
  %684 = vmatprep.subr.mxu0 0.0
  %685 = vmatpush2.msra.mxu0 0.0
  %686 = vmatprep.subr.mxu0 0.0
  %687 = vmatpush2.msra.mxu0 0.0
  %688 = vmatprep.subr.mxu0 0.0
  %689 = vmatpush2.msra.mxu0 0.0
  %690 = vmatprep.subr.mxu0 0.0
  %691 = vmatpush2.msra.mxu0 0.0
  %692 = vmatprep.subr.mxu0 0.0
  %693 = vmatpush2.msra.mxu0 0.0
  %694 = vmatprep.subr.mxu0 0.0
  %695 = vmatpush2.msra.mxu0 0.0
  %696 = vmatprep.subr.mxu0 0.0
  %697 = vmatpush2.msra.mxu0 0.0
  %698 = vmatprep.subr.mxu0 0.0
  %699 = vmatpush2.msra.mxu0 0.0
  %700 = vmatprep.subr.mxu0 0.0
  %701 = vmatpush2.msra.mxu0 0.0
  %702 = vmatprep.mubr.f32.mxu0 0.0
  %703 = vmatmul.mubr.f32.gmra.mxu0 %v636
  %v704 = vpop.f32.mrf.mxu0
  %v705 = vadd.f32 0.0, %v704
  %v706 = vpop.f32.mrf.mxu0
  %707 = vdwg.mxu0
  %709 = vrot.lane.b32.xlu0 %v705, 120
  %v710 = vpop.permute.xlu0 %709
  %v712 = vmul.f32 %v634, %v710
  %v713 = vadd.f32 %v627, %v712
  %v714 = vsel %vm26, %v705, 0
  %716 = vmatprep.subr.mxu0 0.0
  %717 = vmatpush1.msra.mxu0 0.0
  %718 = vmatprep.subr.mxu0 0.0
  %719 = vmatpush1.msra.mxu0 0.0
  %720 = vmatprep.subr.mxu0 0.0
  %721 = vmatpush1.msra.mxu0 0.0
  %722 = vmatprep.subr.mxu0 0.0
  %723 = vmatpush1.msra.mxu0 0.0
  %724 = vmatprep.subr.mxu0 0.0
  %725 = vmatpush1.msra.mxu0 0.0
  %726 = vmatprep.subr.mxu0 0.0
  %727 = vmatpush1.msra.mxu0 0.0
  %728 = vmatprep.subr.mxu0 0.0
  %729 = vmatpush1.msra.mxu0 0.0
  %730 = vmatprep.subr.mxu0 0.0
  %731 = vmatpush1.msra.mxu0 0.0
  %732 = vmatprep.subr.mxu0 0.0
  %733 = vmatpush1.msra.mxu0 0.0
  %734 = vmatprep.subr.mxu0 0.0
  %735 = vmatpush1.msra.mxu0 0.0
  %736 = vmatprep.subr.mxu0 0.0
  %737 = vmatpush1.msra.mxu0 0.0
  %738 = vmatprep.subr.mxu0 0.0
  %739 = vmatpush1.msra.mxu0 0.0
  %740 = vmatprep.subr.mxu0 0.0
  %741 = vmatpush1.msra.mxu0 0.0
  %742 = vmatprep.subr.mxu0 0.0
  %743 = vmatpush1.msra.mxu0 0.0
  %744 = vmatprep.subr.mxu0 0.0
  %745 = vmatpush1.msra.mxu0 0.0
  %746 = vmatprep.subr.mxu0 0.0
  %747 = vmatpush1.msra.mxu0 %v19
  %748 = vmatprep.subr.mxu0 0.0
  %749 = vmatpush2.msra.mxu0 0.0
  %750 = vmatprep.subr.mxu0 0.0
  %751 = vmatpush2.msra.mxu0 0.0
  %752 = vmatprep.subr.mxu0 0.0
  %753 = vmatpush2.msra.mxu0 0.0
  %754 = vmatprep.subr.mxu0 0.0
  %755 = vmatpush2.msra.mxu0 0.0
  %756 = vmatprep.subr.mxu0 0.0
  %757 = vmatpush2.msra.mxu0 0.0
  %758 = vmatprep.subr.mxu0 0.0
  %759 = vmatpush2.msra.mxu0 0.0
  %760 = vmatprep.subr.mxu0 0.0
  %761 = vmatpush2.msra.mxu0 0.0
  %762 = vmatprep.subr.mxu0 0.0
  %763 = vmatpush2.msra.mxu0 0.0
  %764 = vmatprep.subr.mxu0 0.0
  %765 = vmatpush2.msra.mxu0 0.0
  %766 = vmatprep.subr.mxu0 0.0
  %767 = vmatpush2.msra.mxu0 0.0
  %768 = vmatprep.subr.mxu0 0.0
  %769 = vmatpush2.msra.mxu0 0.0
  %770 = vmatprep.subr.mxu0 0.0
  %771 = vmatpush2.msra.mxu0 0.0
  %772 = vmatprep.subr.mxu0 0.0
  %773 = vmatpush2.msra.mxu0 0.0
  %774 = vmatprep.subr.mxu0 0.0
  %775 = vmatpush2.msra.mxu0 0.0
  %776 = vmatprep.subr.mxu0 0.0
  %777 = vmatpush2.msra.mxu0 0.0
  %778 = vmatprep.subr.mxu0 0.0
  %779 = vmatpush2.msra.mxu0 0.0
  %780 = vmatprep.mubr.f32.mxu0 0.0
  %781 = vmatmul.mubr.f32.gmra.mxu0 %v714
  %v782 = vpop.f32.mrf.mxu0
  %v783 = vadd.f32 0.0, %v782
  %v784 = vpop.f32.mrf.mxu0
  %785 = vdwg.mxu0
  %v786 = vsel %vm28, %v713, 0.0
  %787 = vadd.xlane.f32.xlu0 %v786
  %v788 = vpop.xlane.xlu0 %787
  %v789 = vmul.f32 %v783, %v705
  %v790 = vsel %vm26, %v789, 0.0
  %791 = vadd.xlane.f32.xlu0 %v790
  %v792 = vpop.xlane.xlu0 %791
  %v793 = vadd.f32 %v788, %v792
  %v794 = vmul.f32 %v793, 0.5
  %vm795 = vcmask 7168
  %796 = vst.msk [vmem:[%s4] sm:$0xff] %vm795, %v794
  // Predicated region
  $region18: #{mpc_forward_pallas.1} parent=0 // pred_check
    _
  $region19: #{mpc_forward_pallas.1} parent=0 // pred_check_branch
    %798 = sbr.rel (0) target = $region21
  $region20: #{mpc_forward_pallas.1} parent=0 // pred_region
    _
  $region21: #{mpc_forward_pallas.1} parent=0 // pred_fallthru
    _
  // Predicated region
  $region22: #{mpc_forward_pallas.1} parent=0 // pred_check
    _
  $region23: #{mpc_forward_pallas.1} parent=0 // pred_check_branch
    %800 = sbr.rel (0) target = $region25
  $region24: #{mpc_forward_pallas.1} parent=0 // pred_region
    _
  $region25: #{mpc_forward_pallas.1} parent=0 // pred_fallthru
    _

</llo_original>
